<compile_context>
chip_gen: v7x
topology: tpu7x:2x2x1
jax: 0.10.0
libtpu: 0.0.40
codegen_flags: <defaults>
</compile_context>

<pallas_src>
import math

import jax
import jax.numpy as jnp
from jax.experimental import pallas as pl
from jax.experimental.pallas import tpu as pltpu


# ----------------------------------------------------------------------------
# VMEM sizing helpers (generation aware)
# ----------------------------------------------------------------------------
def _physical_vmem_bytes():
    try:
        info = pltpu.get_tpu_info()
        cap = getattr(info, "vmem_capacity_bytes", None)
        if cap:
            return int(cap)
    except Exception:
        pass
    return 64 * 1024 * 1024  # conservative (v7x-sized); safe on v5e/v6e too


def _block_footprint_bytes(b, seq_len, hidden, in_bytes):
    """Double-buffered VMEM footprint for a block of B passages."""
    return (2 * b * seq_len * hidden * in_bytes      # activations (double-buffered)
            + 2 * 3 * b * seq_len * 4                # (3, B*L) f32 output (double-buffered)
            + 2 * 1 * b * seq_len * 4                # score row (double-buffered)
            + 2 * 8 * hidden * in_bytes + 1024)      # fused head weights + bias


def _choose_block_b(nm, seq_len, hidden, in_bytes, budget_bytes,
                    max_b=256, prefer_multi_step=True):
    """Largest B whose double-buffered footprint fits the budget, with B*L a
    multiple of 128 lanes and (when possible) at least two grid steps."""
    lane_step = 128 // math.gcd(seq_len, 128)        # B must be a multiple of this
    cap = min(max(nm, 1), max_b)
    if prefer_multi_step and nm >= 2:
        cap = min(cap, pl.cdiv(nm, 2))               # keep >= 2 grid steps (v7x: 2 TCs)
    cap = max(cap, lane_step)

    best = lane_step
    for b in range(lane_step, cap + 1, lane_step):
        if _block_footprint_bytes(b, seq_len, hidden, in_bytes) <= budget_bytes:
            best = b
    return best


# ----------------------------------------------------------------------------
# Pallas kernel: fused Reader head (qa_outputs + qa_classifier + score scaling)
# ----------------------------------------------------------------------------
def _make_reader_head_kernel(block_b, seq_len, use_score, compute_dtype):
    """Kernel factory so the score path is compiled out when unused."""

    def kernel(seq_ref, w8_ref, b8_ref, *rest):
        if use_score:
            score_ref, out_ref = rest
        else:
            (out_ref,) = rest

        # (B, L, H) -> (B*L, H): free leading-dim merge, H stays on lanes.
        seq = seq_ref[...].reshape(block_b * seq_len, -1)
        if seq.dtype != jnp.dtype(compute_dtype):
            seq = seq.astype(compute_dtype)          # in-VMEM cast, no extra HBM pass

        # One MXU matmul per grid step: (8, H) x (B*L, H)^T -> (8, B*L), f32 acc.
        logits = jax.lax.dot_general(
            w8_ref[...], seq,
            dimension_numbers=(((1,), (1,)), ((), ())),
            preferred_element_type=jnp.float32)

        val = logits + b8_ref[...]                   # (8, 1) bias broadcast over lanes
        if use_score:
            val = val * score_ref[...]               # (1, B*L) per-passage scale

        # Only rows 0..2 are consumed (start / end / rank@CLS): lean, lane-dense store.
        out_ref[...] = val[0:3, :].astype(out_ref.dtype)

    return kernel


def reader_head_pallas(sequence_output, w_qa, b_qa, w_cls, b_cls,
                       scores=None, compute_dtype=jnp.bfloat16):
    """sequence_output: (NM, L, H); w_qa: (2,H); b_qa: (2,); w_cls: (1,H);
    b_cls: (1,); scores: optional (NM,) per-passage scale.
    Returns start (NM,L), end (NM,L), rank (NM,) in f32."""
    NM, L, H = sequence_output.shape
    in_bytes = sequence_output.dtype.itemsize

    phys = _physical_vmem_bytes()
    budget = max(8 << 20, int(phys * 0.4))           # ~51 MiB on v5e/v6e, ~25 MiB on v7x
    B = _choose_block_b(NM, L, H, in_bytes, budget)
    need = _block_footprint_bytes(B, L, H, in_bytes)
    vmem_limit = int(min(phys - (8 << 20),
                         max(budget + (16 << 20), need + (16 << 20))))

    n_blocks = pl.cdiv(NM, B)
    NMp = n_blocks * B

    seq = sequence_output
    if NMp != NM:                                    # pad instead of degrading to B=1
        seq = jnp.pad(seq, ((0, NMp - NM), (0, 0), (0, 0)))

    # Fused weight tile: rows [w_start, w_end, w_cls, 0, 0, 0, 0, 0] -> (8, H)
    w8 = jnp.concatenate(
        [w_qa, w_cls, jnp.zeros((5, H), w_qa.dtype)], axis=0).astype(compute_dtype)
    b8 = jnp.concatenate(
        [b_qa, b_cls, jnp.zeros((5,), b_qa.dtype)]).astype(jnp.float32).reshape(8, 1)

    use_score = scores is not None
    in_specs = [
        pl.BlockSpec((B, L, H), lambda i: (i, 0, 0)),   # activations, native layout
        pl.BlockSpec((8, H), lambda i: (0, 0)),         # fused head weights
        pl.BlockSpec((8, 1), lambda i: (0, 0)),         # fused head bias (f32)
    ]
    args = [seq, w8, b8]
    if use_score:
        s = scores.astype(jnp.float32).reshape(NM)
        if NMp != NM:
            s = jnp.pad(s, (0, NMp - NM))
        score_row = jnp.broadcast_to(s[:, None], (NMp, L)).reshape(1, NMp * L)
        in_specs.append(pl.BlockSpec((1, B * L), lambda i: (0, i)))
        args.append(score_row)

    kernel = _make_reader_head_kernel(B, L, use_score, compute_dtype)
    out = pl.pallas_call(
        kernel,
        out_shape=jax.ShapeDtypeStruct((3, NMp * L), jnp.float32),
        grid_spec=pltpu.PrefetchScalarGridSpec(
            num_scalar_prefetch=0,
            grid=(n_blocks,),
            in_specs=in_specs,
            out_specs=pl.BlockSpec((3, B * L), lambda i: (0, i)),
        ),
        compiler_params=pltpu.CompilerParams(
            dimension_semantics=("parallel",),
            vmem_limit_bytes=vmem_limit),
    )(*args)

    out = out[:, :NM * L].reshape(3, NM, L)
    start = out[0]               # (NM, L)
    end = out[1]                 # (NM, L)
    rank = out[2, :, 0]          # (NM,) -- w_cls row evaluated at the CLS token
    return start, end, rank


# ----------------------------------------------------------------------------
# Glue: synthetic encoder + full Reader.forward (eval / inference semantics)
# ----------------------------------------------------------------------------
def synthetic_encoder(input_ids, attention_mask, enc, out_dtype=jnp.float32):
    # TODO(synk): the real encoder (e.g. BERT) is an external module passed into
    # Reader; this deterministic stand-in (embedding + dense + tanh, mask-gated)
    # replaces it.
    emb = enc["embedding"][input_ids]                    # (NM, L, H)
    h = jnp.tanh(emb @ enc["w"] + enc["b"])              # (NM, L, H)
    h = h * attention_mask[..., None].astype(h.dtype)
    # Cast fuses with the mask multiply in the encoder's output fusion: the head
    # kernel never needs a standalone HBM cast pass.
    return h.astype(out_dtype)


def reader_forward(params, input_ids, attention_mask,
                   passage_scores=None, do_softmax_before_score_scaling=False,
                   compute_dtype=jnp.bfloat16):
    N, M, L = input_ids.shape
    ii = input_ids.reshape(N * M, L)
    am = attention_mask.reshape(N * M, L)
    seq_out = synthetic_encoder(ii, am, params["encoder"], out_dtype=compute_dtype)

    if passage_scores is not None and not do_softmax_before_score_scaling:
        scores = passage_scores.reshape(N * M)
    else:
        scores = None   # no-score path: multiply compiled out of the kernel

    start, end, rank = reader_head_pallas(
        seq_out, params["w_qa"], params["b_qa"],
        params["w_cls"], params["b_cls"],
        scores=scores, compute_dtype=compute_dtype)

    if passage_scores is not None and do_softmax_before_score_scaling:
        # softmax over dim 0 (across N*M passages) before scaling — JAX glue
        ps = jax.nn.softmax(passage_scores.reshape(N * M, 1).astype(jnp.float32), axis=0)
        rank = jax.nn.softmax(rank.reshape(N * M, 1), axis=0)
        start = start * ps
        end = end * ps
        rank = (rank * ps)[:, 0]

    return start.reshape(N, M, L), end.reshape(N, M, L), rank.reshape(N, M)


def reader_forward_ref(params, input_ids, attention_mask,
                       passage_scores=None, do_softmax_before_score_scaling=False):
    """Pure-JAX f32 reference mirroring the PyTorch forward (eval path)."""
    N, M, L = input_ids.shape
    ii = input_ids.reshape(N * M, L)
    am = attention_mask.reshape(N * M, L)
    seq = synthetic_encoder(ii, am, params["encoder"], out_dtype=jnp.float32)
    logits = seq @ params["w_qa"].T + params["b_qa"]             # (NM, L, 2)
    start, end = logits[..., 0], logits[..., 1]
    rank = seq[:, 0, :] @ params["w_cls"].T + params["b_cls"]    # (NM, 1)
    if passage_scores is not None:
        ps = passage_scores.reshape(N * M, 1)
        if do_softmax_before_score_scaling:
            ps = jax.nn.softmax(ps, axis=0)
            rank = jax.nn.softmax(rank, axis=0)
        start = start * ps
        end = end * ps
        rank = rank * ps
    return start.reshape(N, M, L), end.reshape(N, M, L), rank.reshape(N, M)


# ----------------------------------------------------------------------------
# Main
# ----------------------------------------------------------------------------
if __name__ == "__main__":
    N, M, L, H, V = 2, 2, 128, 32, 50

    key = jax.random.PRNGKey(0)
    k_emb, k_enc, k_qa, k_cls, k_ids, k_ps = jax.random.split(key, 6)

    params = {
        "encoder": {
            "embedding": jax.random.normal(k_emb, (V, H), jnp.float32),
            "w": (1.0 / jnp.sqrt(H)) * jax.random.normal(k_enc, (H, H), jnp.float32),
            "b": jnp.zeros((H,), jnp.float32),
        },
        # nn.Linear(hidden_size, 2): weight (2, H), bias (2,)
        "w_qa": (1.0 / jnp.sqrt(H)) * jax.random.normal(k_qa, (2, H), jnp.float32),
        "b_qa": jnp.zeros((2,), jnp.float32),
        # nn.Linear(hidden_size, 1): weight (1, H), bias (1,)
        "w_cls": (1.0 / jnp.sqrt(H)) * jax.random.normal(k_cls, (1, H), jnp.float32),
        "b_cls": jnp.zeros((1,), jnp.float32),
    }

    input_ids = jax.random.randint(k_ids, (N, M, L), 0, V, dtype=jnp.int32)
    attention_mask = jnp.ones((N, M, L), jnp.int32)
    passage_scores = jax.random.uniform(k_ps, (N, M, 1), jnp.float32)

    s_ref1, e_ref1, r_ref1 = reader_forward_ref(params, input_ids, attention_mask)

    # Branch 0: f32 compute path — near-exact check of the kernel plumbing.
    s0, e0, r0 = reader_forward(params, input_ids, attention_mask,
                                compute_dtype=jnp.float32)
    jax.block_until_ready((s0, e0, r0))
    assert jnp.allclose(s0, s_ref1, atol=1e-4, rtol=1e-4)
    assert jnp.allclose(e0, e_ref1, atol=1e-4, rtol=1e-4)
    assert jnp.allclose(r0, r_ref1, atol=1e-4, rtol=1e-4)

    # bf16 head path (f32 accumulation): looser tolerance vs f32 reference.
    ATOL, RTOL = 3e-2, 3e-2

    # Branch 1: no passage scores (standard eval path)
    s1, e1, r1 = reader_forward(params, input_ids, attention_mask)
    jax.block_until_ready((s1, e1, r1))
    assert jnp.allclose(s1, s_ref1, atol=ATOL, rtol=RTOL)
    assert jnp.allclose(e1, e_ref1, atol=ATOL, rtol=RTOL)
    assert jnp.allclose(r1, r_ref1, atol=ATOL, rtol=RTOL)

    # Branch 2: passage-score scaling fused into the kernel
    s2, e2, r2 = reader_forward(params, input_ids, attention_mask,
                                passage_scores=passage_scores)
    jax.block_until_ready((s2, e2, r2))
    s_ref2, e_ref2, r_ref2 = reader_forward_ref(params, input_ids, attention_mask,
                                                passage_scores=passage_scores)
    assert jnp.allclose(s2, s_ref2, atol=ATOL, rtol=RTOL)
    assert jnp.allclose(e2, e_ref2, atol=ATOL, rtol=RTOL)
    assert jnp.allclose(r2, r_ref2, atol=ATOL, rtol=RTOL)

    # Branch 3: softmax-before-scaling (global softmax done in JAX glue)
    s3, e3, r3 = reader_forward(params, input_ids, attention_mask,
                                passage_scores=passage_scores,
                                do_softmax_before_score_scaling=True)
    jax.block_until_ready((s3, e3, r3))
    s_ref3, e_ref3, r_ref3 = reader_forward_ref(params, input_ids, attention_mask,
                                                passage_scores=passage_scores,
                                                do_softmax_before_score_scaling=True)
    assert jnp.allclose(s3, s_ref3, atol=ATOL, rtol=RTOL)
    assert jnp.allclose(e3, e_ref3, atol=ATOL, rtol=RTOL)
    assert jnp.allclose(r3, r_ref3, atol=ATOL, rtol=RTOL)

    print("KERNEL_OK")
</pallas_src>

<mosaic_0001>
module attributes {stable_mosaic.version = 11 : i64} {
  func.func @kernel(%arg0: i32, %arg1: memref<2x128x32xf32, #tpu.memory_space<vmem>>, %arg2: memref<8x32xf32, #tpu.memory_space<vmem>>, %arg3: memref<8x1xf32, #tpu.memory_space<vmem>>, %arg4: memref<3x256xf32, #tpu.memory_space<vmem>>) attributes {dimension_semantics = [#tpu.dimension_semantics<parallel>], iteration_bounds = array<i64: 2>, scalar_prefetch = 0 : i64, scratch_operands = 0 : i64, tpu.core_type = #tpu.core_type<tc>, window_params = [{transform_indices = @transform_0, window_bounds = array<i64: 2, 128, 32>}, {pipeline_mode = #tpu.pipeline_mode<synchronous>, transform_indices = @transform_1, window_bounds = array<i64: 8, 32>}, {pipeline_mode = #tpu.pipeline_mode<synchronous>, transform_indices = @transform_2, window_bounds = array<i64: 8, 1>}, {transform_indices = @transform_3, window_bounds = array<i64: 3, 256>}]} {
    %c0 = arith.constant 0 : index
    %c0_0 = arith.constant 0 : index
    %c0_1 = arith.constant 0 : index
    %0 = vector.load %arg1[%c0, %c0_0, %c0_1] : memref<2x128x32xf32, #tpu.memory_space<vmem>>, vector<2x128x32xf32>
    %1 = vector.shape_cast %0 : vector<2x128x32xf32> to vector<256x32xf32>
    %c0_2 = arith.constant 0 : index
    %c0_3 = arith.constant 0 : index
    %2 = vector.load %arg2[%c0_2, %c0_3] : memref<8x32xf32, #tpu.memory_space<vmem>>, vector<8x32xf32>
    %cst = arith.constant dense<0.000000e+00> : vector<8x256xf32>
    %3 = tpu.matmul %2, %1, %cst {dimension_numbers = #tpu.dot_dimension_numbers<[1], [1], [0], [0], [0, 0, 1, 0], [], []>} : vector<8x32xf32>, vector<256x32xf32>, vector<8x256xf32> -> vector<8x256xf32>
    %c0_4 = arith.constant 0 : index
    %c0_5 = arith.constant 0 : index
    %4 = vector.load %arg3[%c0_4, %c0_5] : memref<8x1xf32, #tpu.memory_space<vmem>>, vector<8x1xf32>
    %5 = vector.broadcast %4 : vector<8x1xf32> to vector<8x256xf32>
    %6 = arith.addf %3, %5 : vector<8x256xf32>
    %7 = vector.extract_strided_slice %6 {offsets = [0, 0], sizes = [3, 256], strides = [1, 1]} : vector<8x256xf32> to vector<3x256xf32>
    %c0_6 = arith.constant 0 : index
    %c0_7 = arith.constant 0 : index
    %8 = vector.load %arg4[%c0_6, %c0_7] : memref<3x256xf32, #tpu.memory_space<vmem>>, vector<3x256xf32>
    tpu.vector_store %arg4[%c0_6, %c0_7], %7 {strides = array<i32>} : memref<3x256xf32, #tpu.memory_space<vmem>>, vector<3x256xf32>,
    return
  }
  func.func @transform_0(%arg0: i32) -> (i32, i32, i32) {
    %c0_i32 = arith.constant 0 : i32
    %c0_i32_0 = arith.constant 0 : i32
    %c0_i32_1 = arith.constant 0 : i32
    return %arg0, %c0_i32, %c0_i32_0 : i32, i32, i32
  }
  func.func @transform_1(%arg0: i32) -> (i32, i32) {
    %c0_i32 = arith.constant 0 : i32
    %c0_i32_0 = arith.constant 0 : i32
    %c0_i32_1 = arith.constant 0 : i32
    return %c0_i32, %c0_i32_0 : i32, i32
  }
  func.func @transform_2(%arg0: i32) -> (i32, i32) {
    %c0_i32 = arith.constant 0 : i32
    %c0_i32_0 = arith.constant 0 : i32
    %c0_i32_1 = arith.constant 0 : i32
    return %c0_i32, %c0_i32_0 : i32, i32
  }
  func.func @transform_3(%arg0: i32) -> (i32, i32) {
    %c0_i32 = arith.constant 0 : i32
    %c0_i32_0 = arith.constant 0 : i32
    return %c0_i32, %arg0 : i32, i32
  }
}

</mosaic_0001>

<llo_original>
// kernel: tpu_custom_call.1
$region0: #{tpu_custom_call.1}
  #allocation0 [shape = 'u32[]', space=smem, size = 0x4, offset = 0x4, fixed_abs, tag = 'smem constant byte address 0x4 - core index']
  #allocation1 [shape = 'u32[144,128]{1,0:T(1,128)}', space=vmem, size = 0x12000, scoped, tag = 'internal scratch']
  %s0 = inlined_call_operand.vmem [shape: f32[4,128,32], index: 0, kind: input, shape index: {}]
  %s1 = inlined_call_operand.vmem [shape: f32[8,32], index: 1, kind: input, shape index: {}]
  %s2 = inlined_call_operand.vmem [shape: f32[8,1], index: 2, kind: input, shape index: {}]
  %s3 = inlined_call_operand.hbm [shape: f32[3,512], index: 3, kind: output, shape index: {}]
  %s4 = sld [smem:[#allocation0]]
  $region45: #{tpu_custom_call.1} parent=0
    _
  %s6 = ssub.s32 1, %s4
  %s7 = scalar_select 0, %s6, %s4
  $region1: #{tpu_custom_call.1} parent=0
    #allocation2 [shape = 'u8[8192]{0}', space=vmem, size = 0x2000, scoped, tag = 'output window, operand 0']
    #allocation3 [shape = 's32[2]{0}', space=sflag, size = 0x8, scoped, tag = 'scoped memory for tpu_custom_call.1']
    %8 = vsyncpa [#allocation3], 0
    %s9 = scalar_lea.sflag [#allocation3], 1
    %10 = vsyncpa %s9, 0
    loop: start=0, step=1, limit=4
    $region2: #{tpu_custom_call.1} parent=1 // loop_pre_header
      _
    $region3: #{tpu_custom_call.1} parent=1 // loop_header
      %s12 = sphi 0, %s16
      %p13 = scmp.ge.s32.totalorder %s12, 4
      %s22 = sphi 0, %s24
      %s25 = sphi 0, %s22
      %s26 = sphi 0, %s25
      %s42 = sphi 0, %s26
      %s46 = sphi 0, %s46
      %s48 = sphi 0, %s46
      %s49 = sphi 0, %s48
      %s63 = sphi 0, %s49
      %s67 = sphi 0, %s67
      %s69 = sphi 0, %s67
      %s70 = sphi 0, %s69
      %s84 = sphi 0, %s70
      %s90 = sphi 0, %s92
      %s93 = sphi 0, %s90
      %s94 = sphi 0, %s93
      %s110 = sphi 0, %s94
    $region4: #{tpu_custom_call.1} parent=1 // loop_header_branch
      %15 = sbr.rel (%p13) target = $region8
    $region5: #{tpu_custom_call.1} parent=1 // loop_body
      %s17 = ssub.s32 %s12, 1
      %s18 = ssub.s32 %s12, 2
      %s19 = sadd.s32 %s12, 1
      %s20 = ssub.s32 %s12, %s19
      %p21 = scmp.eq.s32.totalorder %s20, 0
      %s23 = sadd.s32 %s22, 1
      %s24 = scalar_select %p21, %s22, %s23
      %p27 = pneg %p21
      %p28 = scmp.eq.s32.totalorder %s12, 1
      %p29 = por %p27, %p28
      %p30 = scmp.ne.s32.totalorder %s22, %s25
      %p31 = scmp.eq.s32.totalorder %s12, 0
      %p32 = por %p30, %p31
      %p33 = scmp.ne.s32.totalorder %s22, %s25
      %p34 = scmp.eq.s32.totalorder %s17, 1
      %p35 = por %p33, %p34
      %p36 = scmp.ne.s32.totalorder %s25, %s26
      %p37 = scmp.eq.s32.totalorder %s17, 0
      %p38 = por %p36, %p37
      %p39 = scmp.ne.s32.totalorder %s25, %s26
      %p40 = scmp.eq.s32.totalorder %s18, 1
      %p41 = por %p39, %p40
      %p43 = scmp.ne.s32.totalorder %s26, %s42
      %p44 = scmp.eq.s32.totalorder %s18, 0
      %p45 = por %p43, %p44
      %s47 = sadd.s32 %s46, 1
      %p50 = scmp.eq.s32.totalorder %s12, 1
      %p51 = scmp.ne.s32.totalorder %s46, %s48
      %p52 = scmp.eq.s32.totalorder %s12, 0
      %p53 = por %p51, %p52
      %p54 = scmp.ne.s32.totalorder %s46, %s48
      %p55 = scmp.eq.s32.totalorder %s17, 1
      %p56 = por %p54, %p55
      %p57 = scmp.ne.s32.totalorder %s48, %s49
      %p58 = scmp.eq.s32.totalorder %s17, 0
      %p59 = por %p57, %p58
      %p60 = scmp.ne.s32.totalorder %s48, %s49
      %p61 = scmp.eq.s32.totalorder %s18, 1
      %p62 = por %p60, %p61
      %p64 = scmp.ne.s32.totalorder %s49, %s63
      %p65 = scmp.eq.s32.totalorder %s18, 0
      %p66 = por %p64, %p65
      %s68 = sadd.s32 %s67, 1
      %p71 = scmp.eq.s32.totalorder %s12, 1
      %p72 = scmp.ne.s32.totalorder %s67, %s69
      %p73 = scmp.eq.s32.totalorder %s12, 0
      %p74 = por %p72, %p73
      %p75 = scmp.ne.s32.totalorder %s67, %s69
      %p76 = scmp.eq.s32.totalorder %s17, 1
      %p77 = por %p75, %p76
      %p78 = scmp.ne.s32.totalorder %s69, %s70
      %p79 = scmp.eq.s32.totalorder %s17, 0
      %p80 = por %p78, %p79
      %p81 = scmp.ne.s32.totalorder %s69, %s70
      %p82 = scmp.eq.s32.totalorder %s18, 1
      %p83 = por %p81, %p82
      %p85 = scmp.ne.s32.totalorder %s70, %s84
      %p86 = scmp.eq.s32.totalorder %s18, 0
      %p87 = por %p85, %p86
      %s88 = ssub.s32 %s12, %s19
      %p89 = scmp.eq.s32.totalorder %s88, 0
      %s91 = sadd.s32 %s90, 1
      %s92 = scalar_select %p89, %s90, %s91
      %p95 = pneg %p89
      %p96 = scmp.eq.s32.totalorder %s12, 1
      %p97 = por %p95, %p96
      %p98 = scmp.ne.s32.totalorder %s90, %s93
      %p99 = scmp.eq.s32.totalorder %s12, 0
      %p100 = por %p98, %p99
      %p101 = scmp.ne.s32.totalorder %s90, %s93
      %p102 = scmp.eq.s32.totalorder %s17, 1
      %p103 = por %p101, %p102
      %p104 = scmp.ne.s32.totalorder %s93, %s94
      %p105 = scmp.eq.s32.totalorder %s17, 0
      %p106 = por %p104, %p105
      %p107 = scmp.ne.s32.totalorder %s93, %s94
      %p108 = scmp.eq.s32.totalorder %s18, 1
      %p109 = por %p107, %p108
      %p111 = scmp.ne.s32.totalorder %s94, %s110
      %p112 = scmp.eq.s32.totalorder %s18, 0
      %p113 = por %p111, %p112
      %p114 = scmp.le.s32.totalorder 1, %s12
      %p115 = scmp.lt.s32.totalorder %s12, 3
      %p116 = pnand %p114, %p115
      %p117 = pneg %p116
      // Predicated region
      $region9: #{tpu_custom_call.1} parent=5 // pred_check
        _
      $region10: #{tpu_custom_call.1} parent=5 // pred_check_branch
        %119 = sbr.rel (%p116) target = $region12
      $region11: #{tpu_custom_call.1} parent=5 // pred_region
        %s120 = ssub.s32 %s12, 1
        // Predicated region
        $region13: #{tpu_custom_call.1} parent=11 // pred_check
          %p121 = pneg %p59
        $region14: #{tpu_custom_call.1} parent=11 // pred_check_branch
          %123 = sbr.rel (%p121) target = $region16
        $region15: #{tpu_custom_call.1} parent=11 // pred_region
          _
        $region16: #{tpu_custom_call.1} parent=11 // pred_fallthru
          _
        // Predicated region
        $region17: #{tpu_custom_call.1} parent=11 // pred_check
          %p124 = pneg %p80
        $region18: #{tpu_custom_call.1} parent=11 // pred_check_branch
          %126 = sbr.rel (%p124) target = $region20
        $region19: #{tpu_custom_call.1} parent=11 // pred_region
          _
        $region20: #{tpu_custom_call.1} parent=11 // pred_fallthru
          _
      $region12: #{tpu_custom_call.1} parent=5 // pred_fallthru
        _
      %p127 = scmp.lt.s32.totalorder %s12, 2
      // Predicated region
      $region21: #{tpu_custom_call.1} parent=5 // pred_check
        %p128 = pneg %p127
      $region22: #{tpu_custom_call.1} parent=5 // pred_check_branch
        %130 = sbr.rel (%p128) target = $region24
      $region23: #{tpu_custom_call.1} parent=5 // pred_region
        // Predicated region
        $region25: #{tpu_custom_call.1} parent=23 // pred_check
          %p131 = pneg %p32
        $region26: #{tpu_custom_call.1} parent=23 // pred_check_branch
          %133 = sbr.rel (%p131) target = $region28
        $region27: #{tpu_custom_call.1} parent=23 // pred_region
          %s134 = smul.u32 2, %s12
          %p135 = scmp.lt.s32.totalorder %s134, 3
          %s136 = scalar_select %p135, %s134, 3
          %s137 = smul.addr %s136, 16
          %s138 = smul.addr %s137, 8
          %s139 = scalar_lea.vmem %s0, %s138
          %s140 = smul.u32 2, %s12
        $region28: #{tpu_custom_call.1} parent=23 // pred_fallthru
          _
      $region24: #{tpu_custom_call.1} parent=5 // pred_fallthru
        _
      %p141 = scmp.le.s32.totalorder 1, %s12
      %p142 = scmp.lt.s32.totalorder %s12, 3
      %p143 = pnand %p141, %p142
      %p144 = pneg %p143
      // Predicated region
      $region29: #{tpu_custom_call.1} parent=5 // pred_check
        _
      $region30: #{tpu_custom_call.1} parent=5 // pred_check_branch
        %146 = sbr.rel (%p143) target = $region32
      $region31: #{tpu_custom_call.1} parent=5 // pred_region
        %s147 = ssub.s32 %s12, 1
        %s148 = smul.u32 2, %s17
        %p149 = scmp.lt.s32.totalorder %s148, 3
        %s150 = scalar_select %p149, %s148, 3
        %s151 = smul.addr %s150, 16
        %s152 = smul.addr %s151, 8
        %s153 = scalar_lea.vmem %s0, %s152
        %p154 = pneg %p38
        %p155 = pneg %p35
        %p156 = pneg %p59
        %p157 = pneg %p56
        %p158 = pneg %p80
        %p159 = pneg %p77
        %p160 = pneg %p106
        %p161 = pneg %p103
        %s162 = sand.u32 %s93, 1
        %s163 = scalar_lea.sflag [#allocation3], %s162
        %s164 = sand.u32 %s93, 1
        %s165 = smul.addr %s164, 8
        %s166 = scalar_lea.vmem [#allocation2], %s165
        %s167 = smul.u32 2, %s17
        %p168 = scmp.lt.s32.totalorder %s167, 3
        %s169 = scalar_select %p168, %s167, 3
        %s170 = smul.addr %s169, 16
        %s171 = smul.addr %s170, 8
        %s172 = scalar_lea.vmem %s0, %s171
        %s173 = smul.u32 2, %s17
        %s174 = smul.u32 2, %s17
        %v175 = vld [vmem:[%s172] sm:$0xff]
        %v176 = vld [vmem:[%s172 + $0x8] sm:$0xff]
        %v177 = vld [vmem:[%s172 + $0x10] sm:$0xff]
        %v178 = vld [vmem:[%s172 + $0x18] sm:$0xff]
        %v179 = vld [vmem:[%s172 + $0x20] sm:$0xff]
        %v180 = vld [vmem:[%s172 + $0x28] sm:$0xff]
        %v181 = vld [vmem:[%s172 + $0x30] sm:$0xff]
        %v182 = vld [vmem:[%s172 + $0x38] sm:$0xff]
        %v183 = vld [vmem:[%s172 + $0x40] sm:$0xff]
        %v184 = vld [vmem:[%s172 + $0x48] sm:$0xff]
        %v185 = vld [vmem:[%s172 + $0x50] sm:$0xff]
        %v186 = vld [vmem:[%s172 + $0x58] sm:$0xff]
        %v187 = vld [vmem:[%s172 + $0x60] sm:$0xff]
        %v188 = vld [vmem:[%s172 + $0x68] sm:$0xff]
        %v189 = vld [vmem:[%s172 + $0x70] sm:$0xff]
        %v190 = vld [vmem:[%s172 + $0x78] sm:$0xff]
        %v191 = vld [vmem:[%s172 + $0x80] sm:$0xff]
        %v192 = vld [vmem:[%s172 + $0x88] sm:$0xff]
        %v193 = vld [vmem:[%s172 + $0x90] sm:$0xff]
        %v194 = vld [vmem:[%s172 + $0x98] sm:$0xff]
        %v195 = vld [vmem:[%s172 + $0xa0] sm:$0xff]
        %v196 = vld [vmem:[%s172 + $0xa8] sm:$0xff]
        %v197 = vld [vmem:[%s172 + $0xb0] sm:$0xff]
        %v198 = vld [vmem:[%s172 + $0xb8] sm:$0xff]
        %v199 = vld [vmem:[%s172 + $0xc0] sm:$0xff]
        %v200 = vld [vmem:[%s172 + $0xc8] sm:$0xff]
        %v201 = vld [vmem:[%s172 + $0xd0] sm:$0xff]
        %v202 = vld [vmem:[%s172 + $0xd8] sm:$0xff]
        %v203 = vld [vmem:[%s172 + $0xe0] sm:$0xff]
        %v204 = vld [vmem:[%s172 + $0xe8] sm:$0xff]
        %v205 = vld [vmem:[%s172 + $0xf0] sm:$0xff]
        %v206 = vld [vmem:[%s172 + $0xf8] sm:$0xff]
        %v207 = vld [vmem:[%s1] sm:$0xff]
        %v208 = vld [vmem:[%s2] sm:$0xff]
        %210 = vset.pattern.permute.xlu0 0
        %211 = vperm.xlu0 %210, %v208
        %v212 = vpop.permute.xlu0 %211
        %vm214 = vcmask 261120
        %v216 = vsel %vm214, %v207, 0
        %v219 = vsel %vm214, %v175, 0
        %v222 = vsel %vm214, %v176, 0
        %v225 = vsel %vm214, %v177, 0
        %v228 = vsel %vm214, %v178, 0
        %v231 = vsel %vm214, %v179, 0
        %v234 = vsel %vm214, %v180, 0
        %v237 = vsel %vm214, %v181, 0
        %v240 = vsel %vm214, %v182, 0
        %v243 = vsel %vm214, %v183, 0
        %v246 = vsel %vm214, %v184, 0
        %v249 = vsel %vm214, %v185, 0
        %v252 = vsel %vm214, %v186, 0
        %v255 = vsel %vm214, %v187, 0
        %v258 = vsel %vm214, %v188, 0
        %v261 = vsel %vm214, %v189, 0
        %v264 = vsel %vm214, %v190, 0
        %v267 = vsel %vm214, %v191, 0
        %v270 = vsel %vm214, %v192, 0
        %v273 = vsel %vm214, %v193, 0
        %v276 = vsel %vm214, %v194, 0
        %v279 = vsel %vm214, %v195, 0
        %v282 = vsel %vm214, %v196, 0
        %v285 = vsel %vm214, %v197, 0
        %v288 = vsel %vm214, %v198, 0
        %v291 = vsel %vm214, %v199, 0
        %v294 = vsel %vm214, %v200, 0
        %v297 = vsel %vm214, %v201, 0
        %v300 = vsel %vm214, %v202, 0
        %v303 = vsel %vm214, %v203, 0
        %v306 = vsel %vm214, %v204, 0
        %v309 = vsel %vm214, %v205, 0
        %v312 = vsel %vm214, %v206, 0
        %314 = vmatprep.subr.mxu0 0.0
        %315 = vmatpush1.xpose.msra.mxu0 %v219
        %316 = vmatprep.subr.mxu0 0.0
        %317 = vmatpush1.xpose.msra.mxu0 %v222
        %318 = vmatprep.subr.mxu0 0.0
        %319 = vmatpush1.xpose.msra.mxu0 %v225
        %320 = vmatprep.subr.mxu0 0.0
        %321 = vmatpush1.xpose.msra.mxu0 %v228
        %322 = vmatprep.subr.mxu0 0.0
        %323 = vmatpush1.xpose.msra.mxu0 %v231
        %324 = vmatprep.subr.mxu0 0.0
        %325 = vmatpush1.xpose.msra.mxu0 %v234
        %326 = vmatprep.subr.mxu0 0.0
        %327 = vmatpush1.xpose.msra.mxu0 %v237
        %328 = vmatprep.subr.mxu0 0.0
        %329 = vmatpush1.xpose.msra.mxu0 %v240
        %330 = vmatprep.subr.mxu0 0.0
        %331 = vmatpush1.xpose.msra.mxu0 %v243
        %332 = vmatprep.subr.mxu0 0.0
        %333 = vmatpush1.xpose.msra.mxu0 %v246
        %334 = vmatprep.subr.mxu0 0.0
        %335 = vmatpush1.xpose.msra.mxu0 %v249
        %336 = vmatprep.subr.mxu0 0.0
        %337 = vmatpush1.xpose.msra.mxu0 %v252
        %338 = vmatprep.subr.mxu0 0.0
        %339 = vmatpush1.xpose.msra.mxu0 %v255
        %340 = vmatprep.subr.mxu0 0.0
        %341 = vmatpush1.xpose.msra.mxu0 %v258
        %342 = vmatprep.subr.mxu0 0.0
        %343 = vmatpush1.xpose.msra.mxu0 %v261
        %344 = vmatprep.subr.mxu0 0.0
        %345 = vmatpush1.xpose.msra.mxu0 %v264
        %346 = vmatprep.subr.mxu0 0.0
        %347 = vmatpush1.xpose.msra.mxu0 %v267
        %348 = vmatprep.subr.mxu0 0.0
        %349 = vmatpush1.xpose.msra.mxu0 %v270
        %350 = vmatprep.subr.mxu0 0.0
        %351 = vmatpush1.xpose.msra.mxu0 %v273
        %352 = vmatprep.subr.mxu0 0.0
        %353 = vmatpush1.xpose.msra.mxu0 %v276
        %354 = vmatprep.subr.mxu0 0.0
        %355 = vmatpush1.xpose.msra.mxu0 %v279
        %356 = vmatprep.subr.mxu0 0.0
        %357 = vmatpush1.xpose.msra.mxu0 %v282
        %358 = vmatprep.subr.mxu0 0.0
        %359 = vmatpush1.xpose.msra.mxu0 %v285
        %360 = vmatprep.subr.mxu0 0.0
        %361 = vmatpush1.xpose.msra.mxu0 %v288
        %362 = vmatprep.subr.mxu0 0.0
        %363 = vmatpush1.xpose.msra.mxu0 %v291
        %364 = vmatprep.subr.mxu0 0.0
        %365 = vmatpush1.xpose.msra.mxu0 %v294
        %366 = vmatprep.subr.mxu0 0.0
        %367 = vmatpush1.xpose.msra.mxu0 %v297
        %368 = vmatprep.subr.mxu0 0.0
        %369 = vmatpush1.xpose.msra.mxu0 %v300
        %370 = vmatprep.subr.mxu0 0.0
        %371 = vmatpush1.xpose.msra.mxu0 %v303
        %372 = vmatprep.subr.mxu0 0.0
        %373 = vmatpush1.xpose.msra.mxu0 %v306
        %374 = vmatprep.subr.mxu0 0.0
        %375 = vmatpush1.xpose.msra.mxu0 %v309
        %376 = vmatprep.subr.mxu0 0.0
        %377 = vmatpush1.xpose.msra.mxu0 %v312
        %378 = vmatprep.mubr.f32.mxu0 0.0
        %379 = vmatmul.mubr.f32.gmra.mrb[0].mxu0 %v216
        %v380 = vpop.f32.mrb[0].mxu0
        %v381 = vadd.f32 %v212, %v380
        %v382 = vpop.f32.mrb[0].mxu0
        %v383 = vadd.f32 %v212, %v382
        %384 = vdwg.mxu0
        %v387 = vcombine.low %v381, %v383
        %389 = vst [vmem:[%s166] sm:$0x77] %v387
        %s390 = sand.u32 %s93, 1
        %s391 = scalar_lea.sflag [#allocation3], %s390
        %s392 = sand.u32 %s93, 1
        %s393 = smul.addr %s392, 8
        %s394 = scalar_lea.vmem [#allocation2], %s393
        // Predicated region
        $region33: #{tpu_custom_call.1} parent=31 // pred_check
          %p395 = pneg %p103
        $region34: #{tpu_custom_call.1} parent=31 // pred_check_branch
          %397 = sbr.rel (%p395) target = $region36
        $region35: #{tpu_custom_call.1} parent=31 // pred_region
          %s398 = smul.u32 2, %s17
          %s400 = ssub.s32 128, 128
          %401 = vsyncadd %s391, %s400
          %s402 = smul.addr %s398, 64
          %s403 = scalar_lea.hbm %s3, %s402
          %s405 = sshll.u32 %s394, 4
          %s406 = int_to_ptr.vmem [resolvable:$true] %s405
          %408 = dma.vmem_to_hbm [thread:$0]  %s406, 128, %s403, %s391
        $region36: #{tpu_custom_call.1} parent=31 // pred_fallthru
          _
      $region32: #{tpu_custom_call.1} parent=5 // pred_fallthru
        _
      %p409 = scmp.le.s32.totalorder 2, %s12
      // Predicated region
      $region37: #{tpu_custom_call.1} parent=5 // pred_check
        %p410 = pneg %p409
      $region38: #{tpu_custom_call.1} parent=5 // pred_check_branch
        %412 = sbr.rel (%p410) target = $region40
      $region39: #{tpu_custom_call.1} parent=5 // pred_region
        %s413 = ssub.s32 %s12, 2
        // Predicated region
        $region41: #{tpu_custom_call.1} parent=39 // pred_check
          %p414 = pneg %p109
        $region42: #{tpu_custom_call.1} parent=39 // pred_check_branch
          %416 = sbr.rel (%p414) target = $region44
        $region43: #{tpu_custom_call.1} parent=39 // pred_region
          %s417 = sand.u32 %s94, 1
          %s418 = scalar_lea.sflag [#allocation3], %s417
          %s419 = sand.u32 %s94, 1
          %s420 = smul.addr %s419, 8
          %s421 = scalar_lea.vmem [#allocation2], %s420
          %422 = dma.done %s418, 128
        $region44: #{tpu_custom_call.1} parent=39 // pred_fallthru
          _
      $region40: #{tpu_custom_call.1} parent=5 // pred_fallthru
        _
    $region6: #{tpu_custom_call.1} parent=1 // loop_footer
      %s16 = sadd.s32 1, %s12
    $region7: #{tpu_custom_call.1} parent=1 // loop_footer_branch
      %11 = sbr.rel target = $region3
    $region8: #{tpu_custom_call.1} parent=1 // loop_exit
      _
    %423 = vsyncpa [#allocation3], 1
    %s424 = scalar_lea.sflag [#allocation3], 1
    %425 = vsyncpa %s424, 1

</llo_original>
